<compile_context>
chip_gen: v7x
topology: tpu7x:2x2x1
jax: 0.10.0
libtpu: 0.0.40
codegen_flags: <defaults>
</compile_context>

<pallas_src>
import jax
import jax.numpy as jnp
from jax.experimental import pallas as pl
from jax.experimental.pallas import tpu as pltpu


def _round_up(x, m):
    return (x + m - 1) // m * m


def _bf16_vpu_ok():
    """bf16 elementwise epilogue only on v6e/v7x (v5e has no bf16 VPU)."""
    try:
        kind = jax.devices()[0].device_kind.lower()
        return ("v6" in kind) or ("v7" in kind)
    except Exception:  # pragma: no cover - conservative fallback
        return False


def _make_softq_kernel(use_bf16_relu):
    def _softq_kernel(x_ref, w1_ref, w2_ref, w3_ref, b1_ref, b2_ref, b3_ref,
                      o_ref):
        # x_ref:  (d_in, TB) bf16  -- concat(state, action) with batch on lanes
        # w1_ref: (H, d_in) bf16, w2_ref: (H, H) bf16   (MXU operands)
        # w3_ref: (H, 1) f32   (VPU/XLU path, not MXU)
        # b1_ref, b2_ref: (H, 1) f32 ; b3_ref: (1, 1) f32 in SMEM
        # o_ref:  (1, TB) f32  -- lane-dense output row
        x = x_ref[...]

        # Layer 1: single bf16 x bf16 matmul, f32 accumulate, bias, ReLU.
        acc1 = jnp.dot(w1_ref[...], x,
                       preferred_element_type=jnp.float32) + b1_ref[...]
        if use_bf16_relu:
            h1 = jnp.maximum(acc1.astype(jnp.bfloat16), 0)   # bf16 VALU (v6e/v7x)
        else:
            h1 = jnp.maximum(acc1, 0.0).astype(jnp.bfloat16)  # f32 VPU (v5e-safe)

        # Layer 2
        acc2 = jnp.dot(w2_ref[...], h1,
                       preferred_element_type=jnp.float32) + b2_ref[...]
        h2 = jnp.maximum(acc2, 0.0)                           # f32 feed for layer 3

        # Layer 3: single output row -> VPU multiply + sublane (XLU) reduction
        # (keeps the MXU free; a 1-row matmul would waste the systolic array).
        q = jnp.sum(w3_ref[...] * h2, axis=0, keepdims=True) + b3_ref[0, 0]
        o_ref[...] = q.astype(o_ref.dtype)

    return _softq_kernel


def softq_forward(state, action, params, *, block_batch=2048):
    """Pallas implementation of SoftQNet.forward(state, action) -> (batch, 1)."""
    w1, w2, w3_col, b1, b2, b3 = params
    batch, n_states = state.shape
    n_actions = action.shape[1]
    d_in = n_states + n_actions
    hidden = w2.shape[0]
    assert w1.shape == (hidden, d_in)

    # --- batch tile on the lane axis -------------------------------------
    # 1) at least 2 grid steps when the batch allows it (v7x: 2 TCs/chip),
    # 2) no larger than block_batch,
    # 3) VMEM guard: ~3 live f32 (hidden, tb) intermediates must fit in a
    #    conservative ~12 MiB budget (matters at production hidden sizes,
    #    especially on v7x's 64 MiB VMEM).
    tb = min(block_batch, max(128, _round_up(-(-batch // 2), 128)))
    max_tb_fit = max(128, (12 * 1024 * 1024 // (3 * hidden * 4)) // 128 * 128)
    tb = min(tb, max_tb_fit)
    bp = _round_up(batch, tb)
    grid = (bp // tb,)

    # --- wrapper-side layout plumbing ------------------------------------
    # TODO(synk): ideally the producer emits [features, batch] bf16 directly;
    # this transpose/cast/pad is an un-hidden HBM round-trip per call.
    x = jnp.concatenate([state, action], axis=1)       # (B, d_in) f32
    x_t = x.T.astype(jnp.bfloat16)                     # (d_in, B) bf16
    x_t = jnp.pad(x_t, ((0, 0), (0, bp - batch)))      # (d_in, bp)

    resident = dict(pipeline_mode=pl.Buffered(1))      # fetched once, 1 buffer

    out = pl.pallas_call(
        _make_softq_kernel(_bf16_vpu_ok()),
        out_shape=jax.ShapeDtypeStruct((1, bp), jnp.float32),
        grid=grid,
        in_specs=[
            pl.BlockSpec((d_in, tb), lambda i: (0, i)),                 # x tile
            pl.BlockSpec((hidden, d_in), lambda i: (0, 0), **resident),  # W1
            pl.BlockSpec((hidden, hidden), lambda i: (0, 0), **resident),  # W2
            pl.BlockSpec((hidden, 1), lambda i: (0, 0), **resident),    # W3 col
            pl.BlockSpec((hidden, 1), lambda i: (0, 0), **resident),    # b1
            pl.BlockSpec((hidden, 1), lambda i: (0, 0), **resident),    # b2
            pl.BlockSpec(memory_space=pltpu.MemorySpace.SMEM),          # b3
        ],
        out_specs=pl.BlockSpec((1, tb), lambda i: (0, i)),
        compiler_params=pltpu.CompilerParams(
            dimension_semantics=("parallel",),   # v7x: shard batch over 2 TCs
        ),
    )(x_t, w1, w2, w3_col, b1, b2, b3)

    # (1, bp) lane-dense row -> (batch, 1), matching the PyTorch module.
    return out[:, :batch].T


def init_params(key, n_states, n_actions, hidden_dim, init_w=0.003):
    """Mirror PyTorch init; store weights in the kernel-friendly layout.

    linear1/linear2: U(-1/sqrt(fan_in), +) (PyTorch default); linear3: U(-init_w, +).
    Weights kept in PyTorch [out, in] form; W1/W2 stored bf16 (MXU operands),
    W3 column + biases stored f32.
    """
    d_in = n_states + n_actions
    k = jax.random.split(key, 6)

    def uniform(kk, shape, bound):
        return jax.random.uniform(kk, shape, jnp.float32, -bound, bound)

    bound1 = 1.0 / (d_in ** 0.5)
    bound2 = 1.0 / (hidden_dim ** 0.5)
    w1 = uniform(k[0], (hidden_dim, d_in), bound1)       # [out, in]
    b1 = uniform(k[1], (hidden_dim,), bound1)
    w2 = uniform(k[2], (hidden_dim, hidden_dim), bound2)
    b2 = uniform(k[3], (hidden_dim,), bound2)
    w3 = uniform(k[4], (1, hidden_dim), init_w)
    b3 = uniform(k[5], (1, 1), init_w)

    return (w1.astype(jnp.bfloat16),                     # (H, d_in) bf16
            w2.astype(jnp.bfloat16),                     # (H, H)    bf16
            w3.T,                                        # (H, 1)    f32
            b1[:, None],                                 # (H, 1)    f32
            b2[:, None],                                 # (H, 1)    f32
            b3)                                          # (1, 1)    f32


def _reference(state, action, params):
    """Plain-JAX f32 reference with the same (bf16-rounded) weight values."""
    w1, w2, w3_col, b1, b2, b3 = params
    x = jnp.concatenate([state, action], axis=1)                 # (B, d_in)
    h1 = jax.nn.relu(x @ w1.astype(jnp.float32).T + b1[:, 0])
    h2 = jax.nn.relu(h1 @ w2.astype(jnp.float32).T + b2[:, 0])
    return h2 @ w3_col + b3[0, 0]


if __name__ == "__main__":
    n_states, n_actions, hidden_dim = 4, 2, 32
    batch = 8

    key = jax.random.PRNGKey(0)
    kp, ks, ka = jax.random.split(key, 3)
    params = init_params(kp, n_states, n_actions, hidden_dim)

    state = jax.random.normal(ks, (batch, n_states), jnp.float32)
    action = jax.random.normal(ka, (batch, n_actions), jnp.float32)

    q = softq_forward(state, action, params)
    q = jax.block_until_ready(q)

    q_ref = _reference(state, action, params)
    assert q.shape == (batch, 1), q.shape
    # bf16 MXU operands / bf16-cast activations (f32 accumulation) -> tolerance
    # reflects bf16 rounding of the activations; weights are identical.
    assert jnp.allclose(q, q_ref, atol=1e-2, rtol=1e-2), (q, q_ref)

    print("KERNEL_OK")
</pallas_src>

<mosaic_0001>
module attributes {stable_mosaic.version = 11 : i64} {
  func.func @_softq_kernel(%arg0: i32, %arg1: memref<6x128xbf16, #tpu.memory_space<vmem>>, %arg2: memref<32x6xbf16, #tpu.memory_space<vmem>>, %arg3: memref<32x32xbf16, #tpu.memory_space<vmem>>, %arg4: memref<32x1xf32, #tpu.memory_space<vmem>>, %arg5: memref<32x1xf32, #tpu.memory_space<vmem>>, %arg6: memref<32x1xf32, #tpu.memory_space<vmem>>, %arg7: memref<1x1xf32, #tpu.memory_space<smem>>, %arg8: memref<1x128xf32, #tpu.memory_space<vmem>>) attributes {dimension_semantics = [#tpu.dimension_semantics<parallel>], iteration_bounds = array<i64: 1>, scalar_prefetch = 0 : i64, scratch_operands = 0 : i64, tpu.core_type = #tpu.core_type<tc>, window_params = [{transform_indices = @transform_0, window_bounds = array<i64: 6, 128>}, {pipeline_mode = #tpu.pipeline_mode<synchronous>, transform_indices = @transform_1, window_bounds = array<i64: 32, 6>}, {pipeline_mode = #tpu.pipeline_mode<synchronous>, transform_indices = @transform_2, window_bounds = array<i64: 32, 32>}, {pipeline_mode = #tpu.pipeline_mode<synchronous>, transform_indices = @transform_3, window_bounds = array<i64: 32, 1>}, {pipeline_mode = #tpu.pipeline_mode<synchronous>, transform_indices = @transform_4, window_bounds = array<i64: 32, 1>}, {pipeline_mode = #tpu.pipeline_mode<synchronous>, transform_indices = @transform_5, window_bounds = array<i64: 32, 1>}, {transform_indices = @transform_6, window_bounds = array<i64: 1, 1>}, {transform_indices = @transform_7, window_bounds = array<i64: 1, 128>}]} {
    %c0 = arith.constant 0 : index
    %c0_0 = arith.constant 0 : index
    %0 = vector.load %arg1[%c0, %c0_0] : memref<6x128xbf16, #tpu.memory_space<vmem>>, vector<6x128xbf16>
    %c0_1 = arith.constant 0 : index
    %c0_2 = arith.constant 0 : index
    %1 = vector.load %arg2[%c0_1, %c0_2] : memref<32x6xbf16, #tpu.memory_space<vmem>>, vector<32x6xbf16>
    %cst = arith.constant dense<0.000000e+00> : vector<32x128xf32>
    %2 = tpu.matmul %1, %0, %cst {dimension_numbers = #tpu.dot_dimension_numbers<[1], [0], [0], [1], [0, 0, 1, 1], [], []>} : vector<32x6xbf16>, vector<6x128xbf16>, vector<32x128xf32> -> vector<32x128xf32>
    %c0_3 = arith.constant 0 : index
    %c0_4 = arith.constant 0 : index
    %3 = vector.load %arg5[%c0_3, %c0_4] : memref<32x1xf32, #tpu.memory_space<vmem>>, vector<32x1xf32>
    %4 = vector.broadcast %3 : vector<32x1xf32> to vector<32x128xf32>
    %5 = arith.addf %2, %4 : vector<32x128xf32>
    %cst_5 = arith.constant 0.000000e+00 : f32
    %6 = vector.broadcast %cst_5 : f32 to vector<32x128xf32>
    %7 = arith.maximumf %5, %6 : vector<32x128xf32>
    %8 = arith.truncf %7 : vector<32x128xf32> to vector<32x128xbf16>
    %c0_6 = arith.constant 0 : index
    %c0_7 = arith.constant 0 : index
    %9 = vector.load %arg3[%c0_6, %c0_7] : memref<32x32xbf16, #tpu.memory_space<vmem>>, vector<32x32xbf16>
    %cst_8 = arith.constant dense<0.000000e+00> : vector<32x128xf32>
    %10 = tpu.matmul %9, %8, %cst_8 {dimension_numbers = #tpu.dot_dimension_numbers<[1], [0], [0], [1], [0, 0, 1, 1], [], []>} : vector<32x32xbf16>, vector<32x128xbf16>, vector<32x128xf32> -> vector<32x128xf32>
    %c0_9 = arith.constant 0 : index
    %c0_10 = arith.constant 0 : index
    %11 = vector.load %arg6[%c0_9, %c0_10] : memref<32x1xf32, #tpu.memory_space<vmem>>, vector<32x1xf32>
    %12 = vector.broadcast %11 : vector<32x1xf32> to vector<32x128xf32>
    %13 = arith.addf %10, %12 : vector<32x128xf32>
    %cst_11 = arith.constant 0.000000e+00 : f32
    %14 = vector.broadcast %cst_11 : f32 to vector<32x128xf32>
    %15 = arith.maximumf %13, %14 : vector<32x128xf32>
    %c0_12 = arith.constant 0 : index
    %c0_13 = arith.constant 0 : index
    %16 = vector.load %arg4[%c0_12, %c0_13] : memref<32x1xf32, #tpu.memory_space<vmem>>, vector<32x1xf32>
    %17 = vector.broadcast %16 : vector<32x1xf32> to vector<32x128xf32>
    %18 = arith.mulf %17, %15 : vector<32x128xf32>
    %cst_14 = arith.constant dense<0.000000e+00> : vector<128xf32>
    %19 = vector.multi_reduction <add>, %18, %cst_14 [0] : vector<32x128xf32> to vector<128xf32>
    %20 = vector.shape_cast %19 : vector<128xf32> to vector<1x128xf32>
    %c0_15 = arith.constant 0 : index
    %c0_16 = arith.constant 0 : index
    %21 = memref.load %arg7[%c0_15, %c0_16] : memref<1x1xf32, #tpu.memory_space<smem>>
    %22 = vector.broadcast %21 : f32 to vector<1x128xf32>
    %23 = arith.addf %20, %22 : vector<1x128xf32>
    %c0_17 = arith.constant 0 : index
    %c0_18 = arith.constant 0 : index
    %24 = vector.load %arg8[%c0_17, %c0_18] : memref<1x128xf32, #tpu.memory_space<vmem>>, vector<1x128xf32>
    tpu.vector_store %arg8[%c0_17, %c0_18], %23 {strides = array<i32>} : memref<1x128xf32, #tpu.memory_space<vmem>>, vector<1x128xf32>,
    return
  }
  func.func @transform_0(%arg0: i32) -> (i32, i32) {
    %c0_i32 = arith.constant 0 : i32
    %c0_i32_0 = arith.constant 0 : i32
    return %c0_i32, %arg0 : i32, i32
  }
  func.func @transform_1(%arg0: i32) -> (i32, i32) {
    %c0_i32 = arith.constant 0 : i32
    %c0_i32_0 = arith.constant 0 : i32
    %c0_i32_1 = arith.constant 0 : i32
    return %c0_i32, %c0_i32_0 : i32, i32
  }
  func.func @transform_2(%arg0: i32) -> (i32, i32) {
    %c0_i32 = arith.constant 0 : i32
    %c0_i32_0 = arith.constant 0 : i32
    %c0_i32_1 = arith.constant 0 : i32
    return %c0_i32, %c0_i32_0 : i32, i32
  }
  func.func @transform_3(%arg0: i32) -> (i32, i32) {
    %c0_i32 = arith.constant 0 : i32
    %c0_i32_0 = arith.constant 0 : i32
    %c0_i32_1 = arith.constant 0 : i32
    return %c0_i32, %c0_i32_0 : i32, i32
  }
  func.func @transform_4(%arg0: i32) -> (i32, i32) {
    %c0_i32 = arith.constant 0 : i32
    %c0_i32_0 = arith.constant 0 : i32
    %c0_i32_1 = arith.constant 0 : i32
    return %c0_i32, %c0_i32_0 : i32, i32
  }
  func.func @transform_5(%arg0: i32) -> (i32, i32) {
    %c0_i32 = arith.constant 0 : i32
    %c0_i32_0 = arith.constant 0 : i32
    %c0_i32_1 = arith.constant 0 : i32
    return %c0_i32, %c0_i32_0 : i32, i32
  }
  func.func @transform_6(%arg0: i32) -> (i32, i32) {
    %c0_i32 = arith.constant 0 : i32
    %c0_i32_0 = arith.constant 0 : i32
    %c0_i32_1 = arith.constant 0 : i32
    return %c0_i32, %c0_i32_0 : i32, i32
  }
  func.func @transform_7(%arg0: i32) -> (i32, i32) {
    %c0_i32 = arith.constant 0 : i32
    %c0_i32_0 = arith.constant 0 : i32
    return %c0_i32, %arg0 : i32, i32
  }
}

</mosaic_0001>

<llo_original>
// kernel: tpu_custom_call.1
$region0: #{tpu_custom_call.1}
  #allocation0 [shape = 'u32[]', space=smem, size = 0x4, offset = 0x4, fixed_abs, tag = 'smem constant byte address 0x4 - core index']
  #allocation1 [shape = 'u32[144,128]{1,0:T(1,128)}', space=vmem, size = 0x12000, scoped, tag = 'internal scratch']
  #allocation2 [shape = 'f32[1,1]{1,0:T(1,128)S(6)}', space=smem, size = 0x200, scoped, tag = 'scoped memory for tpu_custom_call.1']
  %s0 = inlined_call_operand.vmem [shape: bf16[6,128], index: 0, kind: input, shape index: {}]
  %s1 = inlined_call_operand.vmem [shape: bf16[32,6], index: 1, kind: input, shape index: {}]
  %s2 = inlined_call_operand.vmem [shape: bf16[32,32], index: 2, kind: input, shape index: {}]
  %s3 = inlined_call_operand.vmem [shape: f32[32,1], index: 3, kind: input, shape index: {}]
  %s4 = inlined_call_operand.vmem [shape: f32[32,1], index: 4, kind: input, shape index: {}]
  %s5 = inlined_call_operand.vmem [shape: f32[32,1], index: 5, kind: input, shape index: {}]
  %s6 = inlined_call_operand.<no memory space> [shape: f32[1,1], index: 6, kind: input, shape index: {}]
  %s7 = inlined_call_operand.hbm [shape: f32[1,128], index: 7, kind: output, shape index: {}]
  %s8 = sld [smem:[#allocation0]]
  $region38: #{tpu_custom_call.1} parent=0
    _
  %s10 = ssub.s32 1, %s8
  %s11 = scalar_select 0, %s10, %s8
  %12 = sst [smem:[#allocation2]] %s6
  $region1: #{tpu_custom_call.1} parent=0
    #allocation3 [shape = 'u8[512]{0}', space=vmem, size = 0x400, scoped, tag = 'output window, operand 0, single buffered']
    #allocation4 [shape = 's32[1]{0}', space=sflag, size = 0x4, scoped, tag = 'scoped memory for tpu_custom_call.1']
    %13 = vsyncpa [#allocation4], 0
    // Predicated region
    $region2: #{tpu_custom_call.1} parent=1 // pred_check
      _
    $region3: #{tpu_custom_call.1} parent=1 // pred_check_branch
      %15 = sbr.rel (0) target = $region5
    $region4: #{tpu_custom_call.1} parent=1 // pred_region
      _
    $region5: #{tpu_custom_call.1} parent=1 // pred_fallthru
      _
    // Predicated region
    $region6: #{tpu_custom_call.1} parent=1 // pred_check
      _
    $region7: #{tpu_custom_call.1} parent=1 // pred_check_branch
      %17 = sbr.rel (0) target = $region9
    $region8: #{tpu_custom_call.1} parent=1 // pred_region
      _
    $region9: #{tpu_custom_call.1} parent=1 // pred_fallthru
      _
    // Predicated region
    $region10: #{tpu_custom_call.1} parent=1 // pred_check
      _
    $region11: #{tpu_custom_call.1} parent=1 // pred_check_branch
      %19 = sbr.rel (0) target = $region13
    $region12: #{tpu_custom_call.1} parent=1 // pred_region
      _
    $region13: #{tpu_custom_call.1} parent=1 // pred_fallthru
      _
    // Predicated region
    $region14: #{tpu_custom_call.1} parent=1 // pred_check
      _
    $region15: #{tpu_custom_call.1} parent=1 // pred_check_branch
      %21 = sbr.rel (0) target = $region17
    $region16: #{tpu_custom_call.1} parent=1 // pred_region
      _
    $region17: #{tpu_custom_call.1} parent=1 // pred_fallthru
      _
    // Predicated region
    $region18: #{tpu_custom_call.1} parent=1 // pred_check
      _
    $region19: #{tpu_custom_call.1} parent=1 // pred_check_branch
      %23 = sbr.rel (0) target = $region21
    $region20: #{tpu_custom_call.1} parent=1 // pred_region
      _
    $region21: #{tpu_custom_call.1} parent=1 // pred_fallthru
      _
    // Predicated region
    $region22: #{tpu_custom_call.1} parent=1 // pred_check
      _
    $region23: #{tpu_custom_call.1} parent=1 // pred_check_branch
      %25 = sbr.rel (0) target = $region25
    $region24: #{tpu_custom_call.1} parent=1 // pred_region
      _
    $region25: #{tpu_custom_call.1} parent=1 // pred_fallthru
      _
    // Predicated region
    $region26: #{tpu_custom_call.1} parent=1 // pred_check
      _
    $region27: #{tpu_custom_call.1} parent=1 // pred_check_branch
      %27 = sbr.rel (0) target = $region29
    $region28: #{tpu_custom_call.1} parent=1 // pred_region
      _
    $region29: #{tpu_custom_call.1} parent=1 // pred_fallthru
      _
    %v29 = vld [vmem:[%s0] sm:$0x7]
    %v30 = vld [vmem:[%s1] sm:$0xf]
    %v31 = vld [vmem:[%s1 + $0x4] sm:$0xf]
    %v32 = vld [vmem:[%s1 + $0x8] sm:$0xf]
    %v33 = vld [vmem:[%s1 + $0xc] sm:$0xf]
    %v34 = vld [vmem:[%s4] sm:$0xff]
    %v35 = vld [vmem:[%s4 + $0x8] sm:$0xff]
    %v36 = vld [vmem:[%s4 + $0x10] sm:$0xff]
    %v37 = vld [vmem:[%s4 + $0x18] sm:$0xff]
    %39 = vset.pattern.permute.xlu0 0
    %40 = vperm.xlu0 %39, %v34
    %v41 = vpop.permute.xlu0 %40
    %44 = vset.pattern.permute.xlu0 0
    %45 = vperm.xlu0 %44, %v35
    %v46 = vpop.permute.xlu0 %45
    %49 = vset.pattern.permute.xlu0 0
    %50 = vperm.xlu0 %49, %v36
    %v51 = vpop.permute.xlu0 %50
    %54 = vset.pattern.permute.xlu0 0
    %55 = vperm.xlu0 %54, %v37
    %v56 = vpop.permute.xlu0 %55
    %v62 = vunpack.c.l.b16 %v30
    %v63 = vunpack.c.l.b16 %v31
    %v64 = vunpack.c.l.b16 %v32
    %v65 = vunpack.c.l.b16 %v33
    %v66 = vpack.c.b16 %v63, %v62
    %v67 = vpack.c.b16 %v65, %v64
    %vm68 = vcmask 48128
    %v70 = vsel %vm68, %v66, 0
    %v73 = vsel %vm68, %v67, 0
    %vm75 = vcmask 1042432
    %v77 = vsel %vm75, %v29, 0
    %79 = vmatprep.subr.bf16.mxu0 0
    %80 = vmatpush1.bf16.msra.mxu0 %v77
    %81 = vmatprep.subr.bf16.mxu0 0
    %82 = vmatpush1.bf16.msra.mxu0 0
    %83 = vmatprep.subr.bf16.mxu0 0
    %84 = vmatpush1.bf16.msra.mxu0 0
    %85 = vmatprep.subr.bf16.mxu0 0
    %86 = vmatpush1.bf16.msra.mxu0 0
    %87 = vmatprep.subr.bf16.mxu0 0
    %88 = vmatpush1.bf16.msra.mxu0 0
    %89 = vmatprep.subr.bf16.mxu0 0
    %90 = vmatpush1.bf16.msra.mxu0 0
    %91 = vmatprep.subr.bf16.mxu0 0
    %92 = vmatpush1.bf16.msra.mxu0 0
    %93 = vmatprep.subr.bf16.mxu0 0
    %94 = vmatpush1.bf16.msra.mxu0 0
    %95 = vmatprep.subr.bf16.mxu0 0
    %96 = vmatpush1.bf16.msra.mxu0 0
    %97 = vmatprep.subr.bf16.mxu0 0
    %98 = vmatpush1.bf16.msra.mxu0 0
    %99 = vmatprep.subr.bf16.mxu0 0
    %100 = vmatpush1.bf16.msra.mxu0 0
    %101 = vmatprep.subr.bf16.mxu0 0
    %102 = vmatpush1.bf16.msra.mxu0 0
    %103 = vmatprep.subr.bf16.mxu0 0
    %104 = vmatpush1.bf16.msra.mxu0 0
    %105 = vmatprep.subr.bf16.mxu0 0
    %106 = vmatpush1.bf16.msra.mxu0 0
    %107 = vmatprep.subr.bf16.mxu0 0
    %108 = vmatpush1.bf16.msra.mxu0 0
    %109 = vmatprep.subr.bf16.mxu0 0
    %110 = vmatpush1.bf16.msra.mxu0 0
    %111 = vmatprep.mubr.bf16.mxu0 0
    %112 = vmatmul.mubr.bf16.gmra.mrb[0].mxu0 %v70
    %v113 = vpop.f32.mrb[0].mxu0
    %v114 = vadd.f32 %v41, %v113
    %v115 = vpop.f32.mrb[0].mxu0
    %v116 = vpop.f32.mrb[0].mxu0
    %v117 = vadd.f32 %v46, %v116
    %v118 = vpop.f32.mrb[0].mxu0
    %119 = vmatprep.mubr.bf16.mxu0 0
    %120 = vmatmul.mubr.bf16.gmra.mrb[0].mxu0 %v73
    %v121 = vpop.f32.mrb[0].mxu0
    %v122 = vadd.f32 %v51, %v121
    %v123 = vpop.f32.mrb[0].mxu0
    %v124 = vpop.f32.mrb[0].mxu0
    %v125 = vadd.f32 %v56, %v124
    %v126 = vpop.f32.mrb[0].mxu0
    %127 = vdwg.mxu0
    %v128 = vmax.f32 %v114, 0.0
    %v129 = vmax.f32 %v117, 0.0
    %v130 = vmax.f32 %v122, 0.0
    %v131 = vmax.f32 %v125, 0.0
    %v132 = vpack.c.bf16 %v129, %v128
    %v133 = vpack.c.bf16 %v131, %v130
    %v134 = vld [vmem:[%s2] sm:$0xf]
    %v135 = vld [vmem:[%s2 + $0x4] sm:$0xf]
    %v136 = vld [vmem:[%s2 + $0x8] sm:$0xf]
    %v137 = vld [vmem:[%s2 + $0xc] sm:$0xf]
    %v138 = vld [vmem:[%s5] sm:$0xff]
    %v139 = vld [vmem:[%s5 + $0x8] sm:$0xff]
    %v140 = vld [vmem:[%s5 + $0x10] sm:$0xff]
    %v141 = vld [vmem:[%s5 + $0x18] sm:$0xff]
    %143 = vset.pattern.permute.xlu0 0
    %144 = vperm.xlu0 %143, %v138
    %v145 = vpop.permute.xlu0 %144
    %148 = vset.pattern.permute.xlu0 0
    %149 = vperm.xlu0 %148, %v139
    %v150 = vpop.permute.xlu0 %149
    %153 = vset.pattern.permute.xlu0 0
    %154 = vperm.xlu0 %153, %v140
    %v155 = vpop.permute.xlu0 %154
    %158 = vset.pattern.permute.xlu0 0
    %159 = vperm.xlu0 %158, %v141
    %v160 = vpop.permute.xlu0 %159
    %v166 = vunpack.c.l.b16 %v134
    %v167 = vunpack.c.l.b16 %v135
    %v168 = vunpack.c.l.b16 %v136
    %v169 = vunpack.c.l.b16 %v137
    %v170 = vpack.c.b16 %v167, %v166
    %v171 = vpack.c.b16 %v169, %v168
    %vm172 = vcmask 261120
    %v174 = vsel %vm172, %v170, 0
    %v177 = vsel %vm172, %v171, 0
    %179 = vmatprep.subr.bf16.mxu0 0
    %180 = vmatpush1.bf16.msra.mxu0 %v132
    %181 = vmatprep.subr.bf16.mxu0 0
    %182 = vmatpush1.bf16.msra.mxu0 %v133
    %183 = vmatprep.subr.bf16.mxu0 0
    %184 = vmatpush1.bf16.msra.mxu0 0
    %185 = vmatprep.subr.bf16.mxu0 0
    %186 = vmatpush1.bf16.msra.mxu0 0
    %187 = vmatprep.subr.bf16.mxu0 0
    %188 = vmatpush1.bf16.msra.mxu0 0
    %189 = vmatprep.subr.bf16.mxu0 0
    %190 = vmatpush1.bf16.msra.mxu0 0
    %191 = vmatprep.subr.bf16.mxu0 0
    %192 = vmatpush1.bf16.msra.mxu0 0
    %193 = vmatprep.subr.bf16.mxu0 0
    %194 = vmatpush1.bf16.msra.mxu0 0
    %195 = vmatprep.subr.bf16.mxu0 0
    %196 = vmatpush1.bf16.msra.mxu0 0
    %197 = vmatprep.subr.bf16.mxu0 0
    %198 = vmatpush1.bf16.msra.mxu0 0
    %199 = vmatprep.subr.bf16.mxu0 0
    %200 = vmatpush1.bf16.msra.mxu0 0
    %201 = vmatprep.subr.bf16.mxu0 0
    %202 = vmatpush1.bf16.msra.mxu0 0
    %203 = vmatprep.subr.bf16.mxu0 0
    %204 = vmatpush1.bf16.msra.mxu0 0
    %205 = vmatprep.subr.bf16.mxu0 0
    %206 = vmatpush1.bf16.msra.mxu0 0
    %207 = vmatprep.subr.bf16.mxu0 0
    %208 = vmatpush1.bf16.msra.mxu0 0
    %209 = vmatprep.subr.bf16.mxu0 0
    %210 = vmatpush1.bf16.msra.mxu0 0
    %211 = vmatprep.mubr.bf16.mxu0 0
    %212 = vmatmul.mubr.bf16.gmra.mrb[0].mxu0 %v174
    %v213 = vpop.f32.mrb[0].mxu0
    %v214 = vadd.f32 %v145, %v213
    %v215 = vpop.f32.mrb[0].mxu0
    %v216 = vpop.f32.mrb[0].mxu0
    %v217 = vadd.f32 %v150, %v216
    %v218 = vpop.f32.mrb[0].mxu0
    %219 = vmatprep.mubr.bf16.mxu0 0
    %220 = vmatmul.mubr.bf16.gmra.mrb[0].mxu0 %v177
    %v221 = vpop.f32.mrb[0].mxu0
    %v222 = vadd.f32 %v155, %v221
    %v223 = vpop.f32.mrb[0].mxu0
    %v224 = vpop.f32.mrb[0].mxu0
    %v225 = vadd.f32 %v160, %v224
    %v226 = vpop.f32.mrb[0].mxu0
    %227 = vdwg.mxu0
    %v228 = vmax.f32 %v214, 0.0
    %v229 = vmax.f32 %v217, 0.0
    %v230 = vmax.f32 %v222, 0.0
    %v231 = vmax.f32 %v225, 0.0
    %v232 = vld [vmem:[%s3] sm:$0xff]
    %v233 = vld [vmem:[%s3 + $0x8] sm:$0xff]
    %v234 = vld [vmem:[%s3 + $0x10] sm:$0xff]
    %v235 = vld [vmem:[%s3 + $0x18] sm:$0xff]
    %237 = vset.pattern.permute.xlu0 0
    %238 = vperm.xlu0 %237, %v232
    %v239 = vpop.permute.xlu0 %238
    %242 = vset.pattern.permute.xlu0 0
    %243 = vperm.xlu0 %242, %v233
    %v244 = vpop.permute.xlu0 %243
    %247 = vset.pattern.permute.xlu0 0
    %248 = vperm.xlu0 %247, %v234
    %v249 = vpop.permute.xlu0 %248
    %252 = vset.pattern.permute.xlu0 0
    %253 = vperm.xlu0 %252, %v235
    %v254 = vpop.permute.xlu0 %253
    %v256 = vmul.f32 %v239, %v228
    %v257 = vmul.f32 %v244, %v229
    %v258 = vmul.f32 %v249, %v230
    %v259 = vmul.f32 %v254, %v231
    %v260 = vadd.f32 %v256, %v257
    %v261 = vadd.f32 %v260, %v258
    %v262 = vadd.f32 %v261, %v259
    %v263 = vrot.slane %v262, 4
    %v264 = vadd.f32 %v262, %v263
    %v265 = vrot.slane %v264, 2
    %v266 = vadd.f32 %v264, %v265
    %v267 = vrot.slane %v266, 1
    %v268 = vadd.f32 %v266, %v267
    %s269 = sld [smem:[#allocation2]]
    %v270 = vstv %s269
    %v271 = vadd.f32 %v268, %v270
    %272 = vst [vmem:[#allocation3] sm:$0x1] %v271
    // Predicated region
    $region30: #{tpu_custom_call.1} parent=1 // pred_check
      _
    $region31: #{tpu_custom_call.1} parent=1 // pred_check_branch
      %274 = sbr.rel (0) target = $region33
    $region32: #{tpu_custom_call.1} parent=1 // pred_region
      %s276 = ssub.s32 16, 16
      %277 = vsyncadd [#allocation4], %s276
      %s279 = sshll.u32 [#allocation3], 4
      %s280 = int_to_ptr.vmem [resolvable:$true] %s279
      %282 = dma.vmem_to_hbm [thread:$0]  %s280, 16, %s7, [#allocation4]
    $region33: #{tpu_custom_call.1} parent=1 // pred_fallthru
      _
    // Predicated region
    $region34: #{tpu_custom_call.1} parent=1 // pred_check
      _
    $region35: #{tpu_custom_call.1} parent=1 // pred_check_branch
      %284 = sbr.rel (0) target = $region37
    $region36: #{tpu_custom_call.1} parent=1 // pred_region
      %285 = dma.done [#allocation4], 16
    $region37: #{tpu_custom_call.1} parent=1 // pred_fallthru
      _
    %286 = vsyncpa [#allocation4], 1

</llo_original>
